<compile_context>
chip_gen: v6e
topology: v6e:2x2x1
jax: 0.10.0
libtpu: 0.0.40
codegen_flags: <defaults>
</compile_context>

<pallas_src>
import math
from typing import NamedTuple, Optional

import jax
import jax.numpy as jnp
from jax.experimental import pallas as pl
from jax.experimental.pallas import tpu as pltpu


def _round_up(x: int, m: int) -> int:
    return ((x + m - 1) // m) * m


def _pick_tile(dim: int, candidates, min_tiles: int = 1, max_overshoot: float = 1.3) -> int:
    """Pick a tile size that divides the padded dim with bounded waste.

    `dim` is already rounded to the hardware granularity (8 or 128).  Prefer
    candidates that yield >= min_tiles tiles (megacore), then the LARGEST tile
    whose round-up overshoot stays within `max_overshoot`, else minimize waste.
    """
    feasible = [c for c in candidates if _round_up(dim, c) // c >= min_tiles]
    pool = feasible if feasible else list(candidates)
    within = [c for c in pool if _round_up(dim, c) <= max_overshoot * dim]
    if within:
        return max(within)
    return min(pool, key=lambda c: (_round_up(dim, c) - dim, -c))


def _lane_tile_candidates(cap: int):
    cands = [c for c in (1024, 512, 384, 256, 128) if c <= cap]
    return cands or [128]


def _row_tile_candidates(cap: int):
    cands = [c for c in (1024, 512, 384, 256, 128, 64, 32, 16, 8) if c <= cap]
    return cands or [8]


def _default_vmem_limit_bytes() -> int:
    """Generation-aware scoped-VMEM budget (~75% of physical, capped at 96 MiB).

    v7x (64 MiB physical) -> 48 MiB; v5e/v6e (128 MiB) -> 96 MiB.  Falls back to a
    v7x-safe 48 MiB if the hardware query is unavailable.
    """
    try:
        phys = int(pltpu.get_tpu_info().vmem_capacity_bytes)
    except Exception:  # pragma: no cover - conservative fallback
        phys = 64 << 20
    return max(32 << 20, min(phys * 3 // 4, 96 << 20))


class PreparedWeight(NamedTuple):
    """Pre-transposed + padded weight and its tiling (hoisted out of the call path)."""
    w_p: jax.Array          # (k_pad, f_pad) = pad(weight.T), optionally cast
    in_features: int
    out_features: int
    k_pad: int
    f_pad: int
    tk: int
    tn: int


def prepare_weight(weight, *, max_tk: int = 512, max_tn: int = 512,
                   compute_dtype=None) -> PreparedWeight:
    """Transpose (out,in)->(in,out), pad to lane-dense multiples of 128, pick tiles.

    Call once per parameter set and pass the result to mylinear_forward(prepared=...)
    so the per-call transpose+pad HBM traffic is avoided.
    """
    out_features, in_features = weight.shape
    k_pad0 = _round_up(in_features, 128)
    f_pad0 = _round_up(out_features, 128)
    tk = _pick_tile(k_pad0, _lane_tile_candidates(max_tk))
    # Prefer >=2 out-feature tiles so the 'parallel' j axis feeds both v7x TensorCores.
    tn = _pick_tile(f_pad0, _lane_tile_candidates(max_tn),
                    min_tiles=2 if f_pad0 >= 256 else 1)
    k_pad = _round_up(k_pad0, tk)
    f_pad = _round_up(f_pad0, tn)
    w_t = weight.T
    if compute_dtype is not None:
        w_t = w_t.astype(compute_dtype)
    w_p = jnp.pad(w_t, ((0, k_pad - in_features), (0, f_pad - out_features)))
    return PreparedWeight(w_p, in_features, out_features, k_pad, f_pad, tk, tn)


def _matmul_stats_kernel(x_ref, w_ref, y_ref, sum_ref, ssq_ref, acc_ref):
    """Pass 1: y = x @ w (f32 accumulation) + per-feature sum / sum-of-squares.

    Grid: (j out-tiles [parallel], i N-tiles, k K-tiles [innermost reduction]).
    x_ref: (tm, tk), w_ref: (tk, tn) -- weight already (in, out): no in-kernel transpose.
    y_ref: (tm, tn) in intermediate_dtype (bf16 by default); stats are taken from the
    f32 accumulator BEFORE the cast, so they stay exact.  sum_ref/ssq_ref: (1, tn) f32,
    resident across (i, k) -> correct batch stats under row tiling.
    """
    i = pl.program_id(1)
    k = pl.program_id(2)

    @pl.when(k == 0)
    def _():
        acc_ref[...] = jnp.zeros_like(acc_ref)

    # No operand upcast; MXU accumulates in f32 (bf16 operands run at full rate).
    acc_ref[...] += jnp.dot(x_ref[...], w_ref[...],
                            preferred_element_type=jnp.float32)

    @pl.when(k == pl.num_programs(2) - 1)
    def _():
        y = acc_ref[...]
        # Linear bias omitted: BN (training) + Identity cancels a per-feature constant.
        y_ref[...] = y.astype(y_ref.dtype)

        @pl.when(i == 0)
        def _():
            sum_ref[...] = jnp.zeros_like(sum_ref)
            ssq_ref[...] = jnp.zeros_like(ssq_ref)

        sum_ref[...] += jnp.sum(y, axis=0, keepdims=True)
        ssq_ref[...] += jnp.sum(y * y, axis=0, keepdims=True)


def _bn_apply_kernel(y_ref, scale_ref, shift_ref, o_ref):
    """Pass 2: out = y * scale + shift (scale/shift precomputed per feature)."""
    o_ref[...] = (y_ref[...].astype(jnp.float32) * scale_ref[...]
                  + shift_ref[...]).astype(o_ref.dtype)


def mylinear_forward(x, weight, bias, gamma, beta, *, eps: float = 1e-5,
                     max_tm: int = 512, max_tn: int = 512, max_tk: int = 512,
                     intermediate_dtype=jnp.bfloat16,
                     compute_dtype=None,
                     vmem_limit_bytes: Optional[int] = None,
                     prepared: Optional[PreparedWeight] = None):
    """x: (..., in_features) -> (..., out_features).

    `bias` is accepted for API parity but intentionally not added: BatchNorm in
    training mode (with Identity activation) subtracts the batch mean right after
    the Linear, so a constant per-feature bias cancels exactly.

    intermediate_dtype: dtype of the N*F pre-BN intermediate round-tripped through
      HBM (bf16 default halves that traffic; use jnp.float32 for bit-faithful f32).
    compute_dtype: optional cast of x (and, via prepare_weight, W) for the matmul,
      e.g. jnp.bfloat16 for full MXU bf16 rate.  Accumulation stays f32 either way.
    """
    del bias  # cancels exactly under BN + Identity (see note above)

    if prepared is None:
        prepared = prepare_weight(weight, max_tk=max_tk, max_tn=max_tn,
                                  compute_dtype=compute_dtype)
    in_features = prepared.in_features
    out_features = prepared.out_features
    k_pad, f_pad = prepared.k_pad, prepared.f_pad
    tk, tn = prepared.tk, prepared.tn
    w_p = prepared.w_p

    x_shape = x.shape
    x_flat = x.reshape(-1, in_features)          # == x.view(-1, x_shape[-1])
    n = x_flat.shape[0]

    # Row tiling: (8-aligned) with bounded padding waste instead of blind round-up.
    n_pad0 = _round_up(n, 8)
    tm = _pick_tile(n_pad0, _row_tile_candidates(max_tm))
    n_pad = _round_up(n_pad0, tm)

    if compute_dtype is not None:
        x_flat = x_flat.astype(compute_dtype)
    x_p = jnp.pad(x_flat, ((0, n_pad - n), (0, k_pad - in_features)))
    g_p = jnp.pad(gamma.reshape(1, -1).astype(jnp.float32),
                  ((0, 0), (0, f_pad - out_features)))
    b_p = jnp.pad(beta.reshape(1, -1).astype(jnp.float32),
                  ((0, 0), (0, f_pad - out_features)))

    vmem_limit = vmem_limit_bytes if vmem_limit_bytes is not None \
        else _default_vmem_limit_bytes()

    x_itemsize = jnp.dtype(x_p.dtype).itemsize
    y_itemsize = jnp.dtype(intermediate_dtype).itemsize
    cost = pl.CostEstimate(
        flops=2 * n_pad * k_pad * f_pad,
        transcendentals=0,
        bytes_accessed=(n_pad * k_pad * x_itemsize            # x
                        + k_pad * f_pad * jnp.dtype(w_p.dtype).itemsize  # w
                        + n_pad * f_pad * y_itemsize          # y intermediate
                        + 2 * f_pad * 4),                     # stats
    )

    # ---- Pass 1: tiled matmul + per-feature sum / sum-of-squares --------------
    grid1 = (f_pad // tn, n_pad // tm, k_pad // tk)
    y, col_sum, col_ssq = pl.pallas_call(
        _matmul_stats_kernel,
        out_shape=(
            jax.ShapeDtypeStruct((n_pad, f_pad), intermediate_dtype),
            jax.ShapeDtypeStruct((1, f_pad), jnp.float32),
            jax.ShapeDtypeStruct((1, f_pad), jnp.float32),
        ),
        grid_spec=pltpu.PrefetchScalarGridSpec(
            num_scalar_prefetch=0,
            grid=grid1,
            in_specs=[
                pl.BlockSpec((tm, tk), lambda j, i, k: (i, k)),
                pl.BlockSpec((tk, tn), lambda j, i, k: (k, j)),
            ],
            out_specs=[
                pl.BlockSpec((tm, tn), lambda j, i, k: (i, j)),
                pl.BlockSpec((1, tn), lambda j, i, k: (0, j)),
                pl.BlockSpec((1, tn), lambda j, i, k: (0, j)),
            ],
            # f32 accumulator scratch is required because y is stored in a narrower
            # dtype; stats are computed from this accumulator (exact).
            scratch_shapes=[pltpu.VMEM((tm, tn), jnp.float32)],
        ),
        compiler_params=pltpu.CompilerParams(
            # TODO(synk): for tiny out_features (single j tile) v7x's second core
            # idles in pass 1; a row-sharded partial-stats + combine variant would fix it.
            dimension_semantics=("parallel", "arbitrary", "arbitrary"),
            vmem_limit_bytes=vmem_limit,
        ),
        cost_estimate=cost,
    )(x_p, w_p)

    # ---- Between passes: per-feature scale/shift, computed ONCE (tiny JAX op) --
    # Single-pass E[y^2]-E[y]^2 in f32; clamp guards cancellation-induced negatives.
    inv_n = jnp.float32(1.0 / n)
    mean = col_sum * inv_n
    var = jnp.maximum(col_ssq * inv_n - mean * mean, 0.0)
    scale = g_p * jax.lax.rsqrt(var + jnp.float32(eps))
    shift = b_p - mean * scale

    # ---- Pass 2: normalize (one FMA per element), fully parallel ---------------
    grid2 = (f_pad // tn, n_pad // tm)
    out_p = pl.pallas_call(
        _bn_apply_kernel,
        out_shape=jax.ShapeDtypeStruct((n_pad, f_pad), x.dtype),
        grid_spec=pltpu.PrefetchScalarGridSpec(
            num_scalar_prefetch=0,
            grid=grid2,
            in_specs=[
                pl.BlockSpec((tm, tn), lambda j, i: (i, j)),
                pl.BlockSpec((1, tn), lambda j, i: (0, j)),
                pl.BlockSpec((1, tn), lambda j, i: (0, j)),
            ],
            out_specs=pl.BlockSpec((tm, tn), lambda j, i: (i, j)),
        ),
        compiler_params=pltpu.CompilerParams(
            dimension_semantics=("parallel", "parallel"),
            vmem_limit_bytes=vmem_limit,
        ),
    )(y, scale, shift)

    out_flat = out_p[:n, :out_features]
    return out_flat.reshape(*x_shape[:-1], out_features)


if __name__ == "__main__":
    in_features = 32
    out_features = 32
    batch, seq = 2, 8  # x: (2, 8, 32) -> flattened to (16, 32) for BatchNorm1d

    key = jax.random.PRNGKey(0)
    kx, kw, kb = jax.random.split(key, 3)

    # Deterministic init mirroring nn.Linear defaults: U(-1/sqrt(in), 1/sqrt(in)).
    bound = 1.0 / math.sqrt(in_features)
    weight = jax.random.uniform(kw, (out_features, in_features),
                                minval=-bound, maxval=bound, dtype=jnp.float32)
    bias = jax.random.uniform(kb, (out_features,),
                              minval=-bound, maxval=bound, dtype=jnp.float32)
    # BatchNorm1d affine at init: gamma=1, beta=0
    gamma = jnp.ones((out_features,), dtype=jnp.float32)
    beta = jnp.zeros((out_features,), dtype=jnp.float32)

    x = jax.random.normal(kx, (batch, seq, in_features), dtype=jnp.float32)

    # Pure-JAX reference (includes the Linear bias; it cancels analytically in BN).
    y_ref = x.reshape(-1, in_features) @ weight.T + bias
    m = y_ref.mean(axis=0, keepdims=True)
    v = ((y_ref - m) ** 2).mean(axis=0, keepdims=True)
    ref = ((y_ref - m) / jnp.sqrt(v + 1e-5) * gamma + beta)
    ref = ref.reshape(batch, seq, out_features)

    # Hoisted (per-parameter-set) weight transpose + pad, reused across calls.
    prepared = prepare_weight(weight)

    # 1) Default fast path: bf16 intermediate (stats in f32) -> looser tolerance.
    out_fast = mylinear_forward(x, weight, bias, gamma, beta, prepared=prepared)
    jax.block_until_ready(out_fast)
    assert out_fast.shape == ref.shape
    assert jnp.allclose(out_fast, ref, atol=3e-2, rtol=3e-2), "bf16-intermediate mismatch"

    # 2) Exact path: f32 intermediate -> tight tolerance vs f32 reference.
    out_exact = mylinear_forward(x, weight, bias, gamma, beta,
                                 intermediate_dtype=jnp.float32, prepared=prepared)
    jax.block_until_ready(out_exact)
    assert jnp.allclose(out_exact, ref, atol=1e-4, rtol=1e-4), "f32 mismatch vs reference"

    # 3) Optional bf16-operand path (full MXU bf16 rate); looser tolerance.
    prepared_bf16 = prepare_weight(weight, compute_dtype=jnp.bfloat16)
    out_bf16 = mylinear_forward(x, weight, bias, gamma, beta,
                                compute_dtype=jnp.bfloat16, prepared=prepared_bf16)
    jax.block_until_ready(out_bf16)
    assert jnp.allclose(out_bf16, ref, atol=6e-2, rtol=6e-2), "bf16-operand mismatch"

    # TODO(synk): BatchNorm1d running_mean/running_var buffer updates (training-time
    # side effect) are not materialized; they do not affect the returned forward output.
    print("KERNEL_OK")
</pallas_src>

<mosaic_0001>
module attributes {stable_mosaic.version = 11 : i64} {
  func.func @_matmul_stats_kernel(%arg0: i32, %arg1: i32, %arg2: i32, %arg3: memref<16x128xf32, #tpu.memory_space<vmem>>, %arg4: memref<128x128xf32, #tpu.memory_space<vmem>>, %arg5: memref<16x128xbf16, #tpu.memory_space<vmem>>, %arg6: memref<1x128xf32, #tpu.memory_space<vmem>>, %arg7: memref<1x128xf32, #tpu.memory_space<vmem>>, %arg8: memref<16x128xf32, #tpu.memory_space<vmem>>) attributes {dimension_semantics = [#tpu.dimension_semantics<parallel>, #tpu.dimension_semantics<arbitrary>, #tpu.dimension_semantics<arbitrary>], iteration_bounds = array<i64: 1, 1, 1>, scalar_prefetch = 0 : i64, scratch_operands = 1 : i64, tpu.core_type = #tpu.core_type<tc>, window_params = [{transform_indices = @transform_0, window_bounds = array<i64: 16, 128>}, {transform_indices = @transform_1, window_bounds = array<i64: 128, 128>}, {transform_indices = @transform_2, window_bounds = array<i64: 16, 128>}, {transform_indices = @transform_3, window_bounds = array<i64: 1, 128>}, {transform_indices = @transform_4, window_bounds = array<i64: 1, 128>}]} {
    %c0_i32 = arith.constant 0 : i32
    %0 = arith.cmpi eq, %arg2, %c0_i32 : i32
    %1 = arith.extui %0 : i1 to i32
    %c0_i32_0 = arith.constant 0 : i32
    %2 = arith.cmpi ne, %1, %c0_i32_0 : i32
    scf.if %2 {
      %cst_10 = arith.constant 0.000000e+00 : f32
      %12 = vector.broadcast %cst_10 : f32 to vector<16x128xf32>
      %c0_11 = arith.constant 0 : index
      %c0_12 = arith.constant 0 : index
      %13 = vector.load %arg8[%c0_11, %c0_12] : memref<16x128xf32, #tpu.memory_space<vmem>>, vector<16x128xf32>
      tpu.vector_store %arg8[%c0_11, %c0_12], %12 {strides = array<i32>} : memref<16x128xf32, #tpu.memory_space<vmem>>, vector<16x128xf32>,
    } else {
    }
    %c0 = arith.constant 0 : index
    %c0_1 = arith.constant 0 : index
    %3 = vector.load %arg8[%c0, %c0_1] : memref<16x128xf32, #tpu.memory_space<vmem>>, vector<16x128xf32>
    %c0_2 = arith.constant 0 : index
    %c0_3 = arith.constant 0 : index
    %4 = vector.load %arg3[%c0_2, %c0_3] : memref<16x128xf32, #tpu.memory_space<vmem>>, vector<16x128xf32>
    %c0_4 = arith.constant 0 : index
    %c0_5 = arith.constant 0 : index
    %5 = vector.load %arg4[%c0_4, %c0_5] : memref<128x128xf32, #tpu.memory_space<vmem>>, vector<128x128xf32>
    %cst = arith.constant dense<0.000000e+00> : vector<16x128xf32>
    %6 = tpu.matmul %4, %5, %cst {dimension_numbers = #tpu.dot_dimension_numbers<[1], [0], [0], [1], [0, 0, 1, 1], [], []>} : vector<16x128xf32>, vector<128x128xf32>, vector<16x128xf32> -> vector<16x128xf32>
    %7 = arith.addf %3, %6 : vector<16x128xf32>
    %c0_6 = arith.constant 0 : index
    %c0_7 = arith.constant 0 : index
    %8 = vector.load %arg8[%c0_6, %c0_7] : memref<16x128xf32, #tpu.memory_space<vmem>>, vector<16x128xf32>
    tpu.vector_store %arg8[%c0_6, %c0_7], %7 {strides = array<i32>} : memref<16x128xf32, #tpu.memory_space<vmem>>, vector<16x128xf32>,
    %c0_i32_8 = arith.constant 0 : i32
    %9 = arith.cmpi eq, %arg2, %c0_i32_8 : i32
    %10 = arith.extui %9 : i1 to i32
    %c0_i32_9 = arith.constant 0 : i32
    %11 = arith.cmpi ne, %10, %c0_i32_9 : i32
    scf.if %11 {
      %c0_10 = arith.constant 0 : index
      %c0_11 = arith.constant 0 : index
      %12 = vector.load %arg8[%c0_10, %c0_11] : memref<16x128xf32, #tpu.memory_space<vmem>>, vector<16x128xf32>
      %13 = arith.truncf %12 : vector<16x128xf32> to vector<16x128xbf16>
      %c0_12 = arith.constant 0 : index
      %c0_13 = arith.constant 0 : index
      %14 = vector.load %arg5[%c0_12, %c0_13] : memref<16x128xbf16, #tpu.memory_space<vmem>>, vector<16x128xbf16>
      tpu.vector_store %arg5[%c0_12, %c0_13], %13 {strides = array<i32>} : memref<16x128xbf16, #tpu.memory_space<vmem>>, vector<16x128xbf16>,
      %c0_i32_14 = arith.constant 0 : i32
      %15 = arith.cmpi eq, %arg1, %c0_i32_14 : i32
      %16 = arith.extui %15 : i1 to i32
      %c0_i32_15 = arith.constant 0 : i32
      %17 = arith.cmpi ne, %16, %c0_i32_15 : i32
      scf.if %17 {
        %cst_26 = arith.constant 0.000000e+00 : f32
        %29 = vector.broadcast %cst_26 : f32 to vector<1x128xf32>
        %c0_27 = arith.constant 0 : index
        %c0_28 = arith.constant 0 : index
        %30 = vector.load %arg6[%c0_27, %c0_28] : memref<1x128xf32, #tpu.memory_space<vmem>>, vector<1x128xf32>
        tpu.vector_store %arg6[%c0_27, %c0_28], %29 {strides = array<i32>} : memref<1x128xf32, #tpu.memory_space<vmem>>, vector<1x128xf32>,
        %cst_29 = arith.constant 0.000000e+00 : f32
        %31 = vector.broadcast %cst_29 : f32 to vector<1x128xf32>
        %c0_30 = arith.constant 0 : index
        %c0_31 = arith.constant 0 : index
        %32 = vector.load %arg7[%c0_30, %c0_31] : memref<1x128xf32, #tpu.memory_space<vmem>>, vector<1x128xf32>
        tpu.vector_store %arg7[%c0_30, %c0_31], %31 {strides = array<i32>} : memref<1x128xf32, #tpu.memory_space<vmem>>, vector<1x128xf32>,
      } else {
      }
      %c0_16 = arith.constant 0 : index
      %c0_17 = arith.constant 0 : index
      %18 = vector.load %arg6[%c0_16, %c0_17] : memref<1x128xf32, #tpu.memory_space<vmem>>, vector<1x128xf32>
      %cst_18 = arith.constant dense<0.000000e+00> : vector<128xf32>
      %19 = vector.multi_reduction <add>, %12, %cst_18 [0] : vector<16x128xf32> to vector<128xf32>
      %20 = vector.shape_cast %19 : vector<128xf32> to vector<1x128xf32>
      %21 = arith.addf %18, %20 : vector<1x128xf32>
      %c0_19 = arith.constant 0 : index
      %c0_20 = arith.constant 0 : index
      %22 = vector.load %arg6[%c0_19, %c0_20] : memref<1x128xf32, #tpu.memory_space<vmem>>, vector<1x128xf32>
      tpu.vector_store %arg6[%c0_19, %c0_20], %21 {strides = array<i32>} : memref<1x128xf32, #tpu.memory_space<vmem>>, vector<1x128xf32>,
      %c0_21 = arith.constant 0 : index
      %c0_22 = arith.constant 0 : index
      %23 = vector.load %arg7[%c0_21, %c0_22] : memref<1x128xf32, #tpu.memory_space<vmem>>, vector<1x128xf32>
      %24 = arith.mulf %12, %12 : vector<16x128xf32>
      %cst_23 = arith.constant dense<0.000000e+00> : vector<128xf32>
      %25 = vector.multi_reduction <add>, %24, %cst_23 [0] : vector<16x128xf32> to vector<128xf32>
      %26 = vector.shape_cast %25 : vector<128xf32> to vector<1x128xf32>
      %27 = arith.addf %23, %26 : vector<1x128xf32>
      %c0_24 = arith.constant 0 : index
      %c0_25 = arith.constant 0 : index
      %28 = vector.load %arg7[%c0_24, %c0_25] : memref<1x128xf32, #tpu.memory_space<vmem>>, vector<1x128xf32>
      tpu.vector_store %arg7[%c0_24, %c0_25], %27 {strides = array<i32>} : memref<1x128xf32, #tpu.memory_space<vmem>>, vector<1x128xf32>,
    } else {
    }
    return
  }
  func.func @transform_0(%arg0: i32, %arg1: i32, %arg2: i32) -> (i32, i32) {
    %c0_i32 = arith.constant 0 : i32
    return %arg1, %arg2 : i32, i32
  }
  func.func @transform_1(%arg0: i32, %arg1: i32, %arg2: i32) -> (i32, i32) {
    %c0_i32 = arith.constant 0 : i32
    return %arg2, %arg0 : i32, i32
  }
  func.func @transform_2(%arg0: i32, %arg1: i32, %arg2: i32) -> (i32, i32) {
    %c0_i32 = arith.constant 0 : i32
    return %arg1, %arg0 : i32, i32
  }
  func.func @transform_3(%arg0: i32, %arg1: i32, %arg2: i32) -> (i32, i32) {
    %c0_i32 = arith.constant 0 : i32
    %c0_i32_0 = arith.constant 0 : i32
    return %c0_i32, %arg0 : i32, i32
  }
  func.func @transform_4(%arg0: i32, %arg1: i32, %arg2: i32) -> (i32, i32) {
    %c0_i32 = arith.constant 0 : i32
    %c0_i32_0 = arith.constant 0 : i32
    return %c0_i32, %arg0 : i32, i32
  }
}

</mosaic_0001>

<llo_original>
// kernel: tpu_custom_call.1
$region0: #{tpu_custom_call.1}
  #allocation0 [shape = 'u32[]', space=smem, size = 0x4, offset = 0x4, fixed_abs, tag = 'smem constant byte address 0x4 - core index']
  #allocation1 [shape = 'u32[144,128]{1,0:T(1,128)}', space=vmem, size = 0x12000, scoped, tag = 'internal scratch']
  #allocation2 [shape = 'f32[16,128]{1,0:T(8,128)}', space=vmem, size = 0x2000, scoped, tag = 'scratch operand']
  %s0 = inlined_call_operand.hbm [shape: f32[16,128], index: 0, kind: input, shape index: {}]
  %s1 = inlined_call_operand.hbm [shape: f32[128,128], index: 1, kind: input, shape index: {}]
  %s2 = inlined_call_operand.hbm [shape: bf16[16,128], index: 2, kind: output, shape index: {0}]
  %s3 = inlined_call_operand.hbm [shape: f32[1,128], index: 3, kind: output, shape index: {1}]
  %s4 = inlined_call_operand.hbm [shape: f32[1,128], index: 4, kind: output, shape index: {2}]
  %5 = xla_tuple %s2, %s3, %s4
  %s6 = sld [smem:[#allocation0]]
  $region54: #{tpu_custom_call.1} parent=0
    _
  %s8 = ssub.s32 1, %s6
  %s9 = scalar_select 0, %s8, %s6
  $region1: #{tpu_custom_call.1} parent=0
    #allocation3 [shape = 'u8[8192]{0}', space=vmem, size = 0x2000, scoped, tag = 'input window, operand 0, single buffered']
    #allocation4 [shape = 's32[1]{0}', space=sflag, size = 0x4, scoped, tag = 'scoped memory for tpu_custom_call.1']
    #allocation5 [shape = 's32[1]{0}', space=sflag, size = 0x4, scoped, tag = 'scoped memory for tpu_custom_call.1']
    #allocation6 [shape = 'u8[65536]{0}', space=vmem, size = 0x10000, scoped, tag = 'input window, operand 1, single buffered']
    #allocation7 [shape = 's32[1]{0}', space=sflag, size = 0x4, scoped, tag = 'scoped memory for tpu_custom_call.1']
    #allocation8 [shape = 'u8[4096]{0}', space=vmem, size = 0x1000, scoped, tag = 'output window, operand 0, single buffered']
    #allocation9 [shape = 'u8[512]{0}', space=vmem, size = 0x400, scoped, tag = 'output window, operand 1, single buffered']
    #allocation10 [shape = 's32[1]{0}', space=sflag, size = 0x4, scoped, tag = 'scoped memory for tpu_custom_call.1']
    #allocation11 [shape = 'u8[512]{0}', space=vmem, size = 0x400, scoped, tag = 'output window, operand 2, single buffered']
    %10 = vsyncpa [#allocation4], 0
    %11 = vsyncpa [#allocation7], 0
    %12 = vsyncpa [#allocation5], 0
    %13 = vsyncpa [#allocation10], 0
    // Predicated region
    $region2: #{tpu_custom_call.1} parent=1 // pred_check
      _
    $region3: #{tpu_custom_call.1} parent=1 // pred_check_branch
      %15 = sbr.rel (0) target = $region5
    $region4: #{tpu_custom_call.1} parent=1 // pred_region
      %s17 = ssub.s32 256, 256
      %18 = vsyncadd [#allocation4], %s17
      %s19 = sshll.u32 [#allocation3], 4
      %s20 = int_to_ptr.vmem [resolvable:$true] %s19
      %25 = dma.hbm_to_vmem [thread:$0]  %s0, 256, %s20, [#allocation4], 128, 128, 8
    $region5: #{tpu_custom_call.1} parent=1 // pred_fallthru
      _
    // Predicated region
    $region6: #{tpu_custom_call.1} parent=1 // pred_check
      _
    $region7: #{tpu_custom_call.1} parent=1 // pred_check_branch
      %27 = sbr.rel (0) target = $region9
    $region8: #{tpu_custom_call.1} parent=1 // pred_region
      %s29 = ssub.s32 2048, 2048
      %30 = vsyncadd [#allocation7], %s29
      %s31 = sshll.u32 [#allocation6], 4
      %s32 = int_to_ptr.vmem [resolvable:$true] %s31
      %37 = dma.hbm_to_vmem [thread:$0]  %s1, 2048, %s32, [#allocation7], 128, 128, 8
    $region9: #{tpu_custom_call.1} parent=1 // pred_fallthru
      _
    // Predicated region
    $region10: #{tpu_custom_call.1} parent=1 // pred_check
      _
    $region11: #{tpu_custom_call.1} parent=1 // pred_check_branch
      %39 = sbr.rel (0) target = $region13
    $region12: #{tpu_custom_call.1} parent=1 // pred_region
      %40 = dma.done [#allocation4], 256
    $region13: #{tpu_custom_call.1} parent=1 // pred_fallthru
      _
    // Predicated region
    $region14: #{tpu_custom_call.1} parent=1 // pred_check
      _
    $region15: #{tpu_custom_call.1} parent=1 // pred_check_branch
      %42 = sbr.rel (0) target = $region17
    $region16: #{tpu_custom_call.1} parent=1 // pred_region
      %43 = dma.done [#allocation7], 2048
    $region17: #{tpu_custom_call.1} parent=1 // pred_fallthru
      _
    %p44 = scmp.eq.s32.totalorder 0, 0
    // Predicated region
    $region18: #{tpu_custom_call.1} parent=1 // pred_check
      %p45 = pneg %p44
    $region19: #{tpu_custom_call.1} parent=1 // pred_check_branch
      %47 = sbr.rel (%p45) target = $region21
    $region20: #{tpu_custom_call.1} parent=1 // pred_region
      %48 = vst [vmem:[#allocation2] sm:$0xff] 0.0
      %49 = vst [vmem:[#allocation2 + $0x8] sm:$0xff] 0.0
    $region21: #{tpu_custom_call.1} parent=1 // pred_fallthru
      _
    %v50 = vld [vmem:[#allocation2] sm:$0xff]
    %v51 = vld [vmem:[#allocation2 + $0x8] sm:$0xff]
    %v52 = vld [vmem:[#allocation3] sm:$0xff]
    %v53 = vld [vmem:[#allocation3 + $0x8] sm:$0xff]
    %v54 = vld [vmem:[#allocation6] sm:$0xff]
    %v55 = vld [vmem:[#allocation6 + $0x8] sm:$0xff]
    %v56 = vld [vmem:[#allocation6 + $0x10] sm:$0xff]
    %v57 = vld [vmem:[#allocation6 + $0x18] sm:$0xff]
    %v58 = vld [vmem:[#allocation6 + $0x20] sm:$0xff]
    %v59 = vld [vmem:[#allocation6 + $0x28] sm:$0xff]
    %v60 = vld [vmem:[#allocation6 + $0x30] sm:$0xff]
    %v61 = vld [vmem:[#allocation6 + $0x38] sm:$0xff]
    %v62 = vld [vmem:[#allocation6 + $0x40] sm:$0xff]
    %v63 = vld [vmem:[#allocation6 + $0x48] sm:$0xff]
    %v64 = vld [vmem:[#allocation6 + $0x50] sm:$0xff]
    %v65 = vld [vmem:[#allocation6 + $0x58] sm:$0xff]
    %v66 = vld [vmem:[#allocation6 + $0x60] sm:$0xff]
    %v67 = vld [vmem:[#allocation6 + $0x68] sm:$0xff]
    %v68 = vld [vmem:[#allocation6 + $0x70] sm:$0xff]
    %v69 = vld [vmem:[#allocation6 + $0x78] sm:$0xff]
    %70 = vmatprep.subr.mxu0 0.0
    %71 = vmatpush1.msra.mxu0 %v69
    %72 = vmatprep.subr.mxu0 0.0
    %73 = vmatpush1.msra.mxu0 %v68
    %74 = vmatprep.subr.mxu0 0.0
    %75 = vmatpush1.msra.mxu0 %v67
    %76 = vmatprep.subr.mxu0 0.0
    %77 = vmatpush1.msra.mxu0 %v66
    %78 = vmatprep.subr.mxu0 0.0
    %79 = vmatpush1.msra.mxu0 %v65
    %80 = vmatprep.subr.mxu0 0.0
    %81 = vmatpush1.msra.mxu0 %v64
    %82 = vmatprep.subr.mxu0 0.0
    %83 = vmatpush1.msra.mxu0 %v63
    %84 = vmatprep.subr.mxu0 0.0
    %85 = vmatpush1.msra.mxu0 %v62
    %86 = vmatprep.subr.mxu0 0.0
    %87 = vmatpush1.msra.mxu0 %v61
    %88 = vmatprep.subr.mxu0 0.0
    %89 = vmatpush1.msra.mxu0 %v60
    %90 = vmatprep.subr.mxu0 0.0
    %91 = vmatpush1.msra.mxu0 %v59
    %92 = vmatprep.subr.mxu0 0.0
    %93 = vmatpush1.msra.mxu0 %v58
    %94 = vmatprep.subr.mxu0 0.0
    %95 = vmatpush1.msra.mxu0 %v57
    %96 = vmatprep.subr.mxu0 0.0
    %97 = vmatpush1.msra.mxu0 %v56
    %98 = vmatprep.subr.mxu0 0.0
    %99 = vmatpush1.msra.mxu0 %v55
    %100 = vmatprep.subr.mxu0 0.0
    %101 = vmatpush1.msra.mxu0 %v54
    %102 = vmatprep.subr.mxu0 0.0
    %103 = vmatpush2.msra.mxu0 0.0
    %104 = vmatprep.subr.mxu0 0.0
    %105 = vmatpush2.msra.mxu0 0.0
    %106 = vmatprep.subr.mxu0 0.0
    %107 = vmatpush2.msra.mxu0 0.0
    %108 = vmatprep.subr.mxu0 0.0
    %109 = vmatpush2.msra.mxu0 0.0
    %110 = vmatprep.subr.mxu0 0.0
    %111 = vmatpush2.msra.mxu0 0.0
    %112 = vmatprep.subr.mxu0 0.0
    %113 = vmatpush2.msra.mxu0 0.0
    %114 = vmatprep.subr.mxu0 0.0
    %115 = vmatpush2.msra.mxu0 0.0
    %116 = vmatprep.subr.mxu0 0.0
    %117 = vmatpush2.msra.mxu0 0.0
    %118 = vmatprep.subr.mxu0 0.0
    %119 = vmatpush2.msra.mxu0 0.0
    %120 = vmatprep.subr.mxu0 0.0
    %121 = vmatpush2.msra.mxu0 0.0
    %122 = vmatprep.subr.mxu0 0.0
    %123 = vmatpush2.msra.mxu0 0.0
    %124 = vmatprep.subr.mxu0 0.0
    %125 = vmatpush2.msra.mxu0 0.0
    %126 = vmatprep.subr.mxu0 0.0
    %127 = vmatpush2.msra.mxu0 0.0
    %128 = vmatprep.subr.mxu0 0.0
    %129 = vmatpush2.msra.mxu0 0.0
    %130 = vmatprep.subr.mxu0 0.0
    %131 = vmatpush2.msra.mxu0 0.0
    %132 = vmatprep.subr.mxu0 0.0
    %133 = vmatpush2.msra.mxu0 0.0
    %134 = vmatprep.mubr.f32.mxu0 0.0
    %135 = vmatmul.mubr.f32.gmra.mxu0 %v52
    %v136 = vpop.f32.mrf.mxu0
    %v137 = vadd.f32 0.0, %v136
    %v138 = vpop.f32.mrf.mxu0
    %139 = vmatprep.mubr.f32.mxu0 0.0
    %140 = vmatmul.mubr.f32.gmra.mxu0 %v53
    %v141 = vpop.f32.mrf.mxu0
    %v142 = vadd.f32 0.0, %v141
    %v143 = vpop.f32.mrf.mxu0
    %144 = vdwg.mxu0
    %v145 = vadd.f32 %v50, %v137
    %v146 = vadd.f32 %v51, %v142
    %147 = vst [vmem:[#allocation2] sm:$0xff] %v145
    %148 = vst [vmem:[#allocation2 + $0x8] sm:$0xff] %v146
    // Predicated region
    $region22: #{tpu_custom_call.1} parent=1 // pred_check
      %p149 = pneg %p44
    $region23: #{tpu_custom_call.1} parent=1 // pred_check_branch
      %151 = sbr.rel (%p149) target = $region25
    $region24: #{tpu_custom_call.1} parent=1 // pred_region
      %v152 = vld [vmem:[#allocation2] sm:$0xff]
      %v153 = vld [vmem:[#allocation2 + $0x8] sm:$0xff]
      %v154 = vpack.c.bf16 %v153, %v152
      %v156 = vunpack.c.l.b16 %v154
      %v157 = vunpack.c.h.b16 %v154
      %v158 = vpack.c.b16 %v156, %v156
      %v159 = vpack.c.b16 %v157, %v157
      %162 = vst [vmem:[#allocation8] sm:$0xf] %v158
      %163 = vst [vmem:[#allocation8 + $0x4] sm:$0xf] %v159
      %p164 = scmp.eq.s32.totalorder 0, 0
      // Predicated region
      $region26: #{tpu_custom_call.1} parent=24 // pred_check
        %p165 = pneg %p164
      $region27: #{tpu_custom_call.1} parent=24 // pred_check_branch
        %167 = sbr.rel (%p165) target = $region29
      $region28: #{tpu_custom_call.1} parent=24 // pred_region
        %168 = vst [vmem:[#allocation9] sm:$0x1] 0.0
        %169 = vst [vmem:[#allocation11] sm:$0x1] 0.0
      $region29: #{tpu_custom_call.1} parent=24 // pred_fallthru
        _
      %v170 = vld [vmem:[#allocation9] sm:$0x1]
      %v171 = vadd.f32 %v152, %v153
      %v172 = vrot.slane %v171, 4
      %v173 = vadd.f32 %v171, %v172
      %v174 = vrot.slane %v173, 2
      %v175 = vadd.f32 %v173, %v174
      %v176 = vrot.slane %v175, 1
      %v177 = vadd.f32 %v175, %v176
      %v178 = vadd.f32 %v170, %v177
      %179 = vst [vmem:[#allocation9] sm:$0x1] %v178
      %v180 = vld [vmem:[#allocation11] sm:$0x1]
      %v181 = vmul.f32 %v152, %v152
      %v182 = vmul.f32 %v153, %v153
      %v183 = vadd.f32 %v181, %v182
      %v184 = vrot.slane %v183, 4
      %v185 = vadd.f32 %v183, %v184
      %v186 = vrot.slane %v185, 2
      %v187 = vadd.f32 %v185, %v186
      %v188 = vrot.slane %v187, 1
      %v189 = vadd.f32 %v187, %v188
      %v190 = vadd.f32 %v180, %v189
      %191 = vst [vmem:[#allocation11] sm:$0x1] %v190
    $region25: #{tpu_custom_call.1} parent=1 // pred_fallthru
      _
    // Predicated region
    $region30: #{tpu_custom_call.1} parent=1 // pred_check
      _
    $region31: #{tpu_custom_call.1} parent=1 // pred_check_branch
      %193 = sbr.rel (0) target = $region33
    $region32: #{tpu_custom_call.1} parent=1 // pred_region
      %s195 = ssub.s32 128, 128
      %196 = vsyncadd [#allocation5], %s195
      %s197 = sshll.u32 [#allocation8], 4
      %s198 = int_to_ptr.vmem [resolvable:$true] %s197
      %203 = dma.vmem_to_hbm [thread:$0]  %s198, 128, %s2, [#allocation5], 64, 64, 4
    $region33: #{tpu_custom_call.1} parent=1 // pred_fallthru
      _
    // Predicated region
    $region34: #{tpu_custom_call.1} parent=1 // pred_check
      _
    $region35: #{tpu_custom_call.1} parent=1 // pred_check_branch
      %205 = sbr.rel (0) target = $region37
    $region36: #{tpu_custom_call.1} parent=1 // pred_region
      %s207 = ssub.s32 16, 16
      %208 = vsyncadd [#allocation10], %s207
      %s210 = sshll.u32 [#allocation9], 4
      %s211 = int_to_ptr.vmem [resolvable:$true] %s210
      %213 = dma.vmem_to_hbm [thread:$0]  %s211, 16, %s3, [#allocation10]
    $region37: #{tpu_custom_call.1} parent=1 // pred_fallthru
      _
    // Predicated region
    $region38: #{tpu_custom_call.1} parent=1 // pred_check
      _
    $region39: #{tpu_custom_call.1} parent=1 // pred_check_branch
      %215 = sbr.rel (0) target = $region41
    $region40: #{tpu_custom_call.1} parent=1 // pred_region
      %s217 = ssub.s32 16, 16
      %218 = vsyncadd [#allocation10], %s217
      %s220 = sshll.u32 [#allocation11], 4
      %s221 = int_to_ptr.vmem [resolvable:$true] %s220
      %223 = dma.vmem_to_hbm [thread:$0]  %s221, 16, %s4, [#allocation10]
    $region41: #{tpu_custom_call.1} parent=1 // pred_fallthru
      _
    // Predicated region
    $region42: #{tpu_custom_call.1} parent=1 // pred_check
      _
    $region43: #{tpu_custom_call.1} parent=1 // pred_check_branch
      %225 = sbr.rel (0) target = $region45
    $region44: #{tpu_custom_call.1} parent=1 // pred_region
      %226 = dma.done [#allocation5], 128
    $region45: #{tpu_custom_call.1} parent=1 // pred_fallthru
      _
    // Predicated region
    $region46: #{tpu_custom_call.1} parent=1 // pred_check
      _
    $region47: #{tpu_custom_call.1} parent=1 // pred_check_branch
      %228 = sbr.rel (0) target = $region49
    $region48: #{tpu_custom_call.1} parent=1 // pred_region
      %229 = dma.done [#allocation10], 16
    $region49: #{tpu_custom_call.1} parent=1 // pred_fallthru
      _
    // Predicated region
    $region50: #{tpu_custom_call.1} parent=1 // pred_check
      _
    $region51: #{tpu_custom_call.1} parent=1 // pred_check_branch
      %231 = sbr.rel (0) target = $region53
    $region52: #{tpu_custom_call.1} parent=1 // pred_region
      %232 = dma.done [#allocation10], 16
    $region53: #{tpu_custom_call.1} parent=1 // pred_fallthru
      _
    %233 = vsyncpa [#allocation4], 1
    %234 = vsyncpa [#allocation7], 1
    %235 = vsyncpa [#allocation5], 1
    %236 = vsyncpa [#allocation10], 1

</llo_original>
